<compile_context>
chip_gen: v7x
topology: tpu7x:2x2x1
jax: 0.10.0
libtpu: 0.0.40
codegen_flags: <defaults>
</compile_context>

<pallas_src>
import jax
import jax.numpy as jnp
from jax.experimental import pallas as pl
from jax.experimental.pallas import tpu as pltpu

LANE = 128        # lane width (last dim, full vreg width -> unmasked stores)
TILE_ROWS = 256   # rows per grid step (multiple of 8)


def _lsgan_disc_kernel(x_ref, o_ref, w_ref, out_ref):
    """Per-tile partial sum of (o - x)^2 * w, reduced to a lane-dense (8, 128) block."""
    d = o_ref[...] - x_ref[...]
    v = d * d * w_ref[...]                       # [TILE_ROWS, LANE]
    # Reduce the 256 rows to an (8, LANE) partial-sum block with tile-aligned
    # static slices (each 8-row slab is exactly one native f32 vreg tile).
    acc = v[0:8, :]
    for r in range(1, TILE_ROWS // 8):
        acc = acc + v[r * 8:(r + 1) * 8, :]
    out_ref[...] = acc


def basic_discriminator_loss(real_outputs, fake_outputs):
    """BasicDiscriminatorLoss.forward: sum_i mean((1 - dr_i)^2) + mean(dg_i^2)."""
    xs, os_, ws = [], [], []
    for dr, dg in zip(real_outputs, fake_outputs):
        drf = dr.astype(jnp.float32).reshape(-1)
        dgf = dg.astype(jnp.float32).reshape(-1)
        # real term: mean((1 - dr)^2)  ->  target 1, weight 1/numel
        xs.append(drf)
        os_.append(jnp.ones_like(drf))
        ws.append(jnp.full(drf.shape, 1.0 / drf.size, jnp.float32))
        # fake term: mean(dg^2)        ->  target 0, weight 1/numel
        xs.append(dgf)
        os_.append(jnp.zeros_like(dgf))
        ws.append(jnp.full(dgf.shape, 1.0 / dgf.size, jnp.float32))

    x = jnp.concatenate(xs)
    o = jnp.concatenate(os_)
    w = jnp.concatenate(ws)

    total = x.shape[0]
    tile_elems = TILE_ROWS * LANE
    padded = ((total + tile_elems - 1) // tile_elems) * tile_elems
    pad = padded - total
    # padding has weight 0 -> contributes exactly 0 to the loss (no mask input needed)
    x = jnp.pad(x, (0, pad)).reshape(-1, LANE)
    o = jnp.pad(o, (0, pad)).reshape(-1, LANE)
    w = jnp.pad(w, (0, pad)).reshape(-1, LANE)

    num_tiles = padded // tile_elems

    partials = pl.pallas_call(
        _lsgan_disc_kernel,
        out_shape=jax.ShapeDtypeStruct((num_tiles * 8, LANE), jnp.float32),
        grid=(num_tiles,),
        in_specs=[
            pl.BlockSpec((TILE_ROWS, LANE), lambda i: (i, 0)),
            pl.BlockSpec((TILE_ROWS, LANE), lambda i: (i, 0)),
            pl.BlockSpec((TILE_ROWS, LANE), lambda i: (i, 0)),
        ],
        out_specs=pl.BlockSpec((8, LANE), lambda i: (i, 0)),
        compiler_params=pltpu.CompilerParams(dimension_semantics=("parallel",)),
    )(x, o, w)

    # final tree reduction of the lane-dense per-tile partials
    return jnp.sum(partials)


def _reference_loss(real_outputs, fake_outputs):
    """Pure-JAX reference matching the PyTorch module."""
    loss = jnp.float32(0.0)
    for dr, dg in zip(real_outputs, fake_outputs):
        dr = dr.astype(jnp.float32)
        dg = dg.astype(jnp.float32)
        loss = loss + jnp.mean((1.0 - dr) ** 2) + jnp.mean(dg ** 2)
    return loss


if __name__ == "__main__":
    key = jax.random.PRNGKey(0)
    # Multi-head discriminator outputs at small shapes (e.g. MSD/MPD style heads).
    shapes = [(2, 1, 64), (2, 1, 32), (2, 4, 16)]
    keys = jax.random.split(key, 2 * len(shapes))
    real_outputs = [jax.random.normal(keys[2 * i], s, jnp.float32)
                    for i, s in enumerate(shapes)]
    fake_outputs = [jax.random.normal(keys[2 * i + 1], s, jnp.float32)
                    for i, s in enumerate(shapes)]

    loss = basic_discriminator_loss(real_outputs, fake_outputs)
    loss = jax.block_until_ready(loss)

    ref = jax.block_until_ready(_reference_loss(real_outputs, fake_outputs))

    assert bool(jnp.isfinite(loss)), "loss is not finite"
    assert abs(float(loss) - float(ref)) < 1e-4 * max(1.0, abs(float(ref))), (
        float(loss), float(ref))
    print("KERNEL_OK")
</pallas_src>

<mosaic_0001>
module attributes {stable_mosaic.version = 11 : i64} {
  func.func @_lsgan_disc_kernel(%arg0: i32, %arg1: memref<256x128xf32, #tpu.memory_space<vmem>>, %arg2: memref<256x128xf32, #tpu.memory_space<vmem>>, %arg3: memref<256x128xf32, #tpu.memory_space<vmem>>, %arg4: memref<8x128xf32, #tpu.memory_space<vmem>>) attributes {dimension_semantics = [#tpu.dimension_semantics<parallel>], iteration_bounds = array<i64: 1>, scalar_prefetch = 0 : i64, scratch_operands = 0 : i64, tpu.core_type = #tpu.core_type<tc>, window_params = [{transform_indices = @transform_0, window_bounds = array<i64: 256, 128>}, {transform_indices = @transform_1, window_bounds = array<i64: 256, 128>}, {transform_indices = @transform_2, window_bounds = array<i64: 256, 128>}, {transform_indices = @transform_3, window_bounds = array<i64: 8, 128>}]} {
    %c0 = arith.constant 0 : index
    %c0_0 = arith.constant 0 : index
    %0 = vector.load %arg2[%c0, %c0_0] : memref<256x128xf32, #tpu.memory_space<vmem>>, vector<256x128xf32>
    %c0_1 = arith.constant 0 : index
    %c0_2 = arith.constant 0 : index
    %1 = vector.load %arg1[%c0_1, %c0_2] : memref<256x128xf32, #tpu.memory_space<vmem>>, vector<256x128xf32>
    %2 = arith.subf %0, %1 : vector<256x128xf32>
    %3 = arith.mulf %2, %2 : vector<256x128xf32>
    %c0_3 = arith.constant 0 : index
    %c0_4 = arith.constant 0 : index
    %4 = vector.load %arg3[%c0_3, %c0_4] : memref<256x128xf32, #tpu.memory_space<vmem>>, vector<256x128xf32>
    %5 = arith.mulf %3, %4 : vector<256x128xf32>
    %6 = vector.extract_strided_slice %5 {offsets = [0, 0], sizes = [8, 128], strides = [1, 1]} : vector<256x128xf32> to vector<8x128xf32>
    %7 = vector.extract_strided_slice %5 {offsets = [8, 0], sizes = [8, 128], strides = [1, 1]} : vector<256x128xf32> to vector<8x128xf32>
    %8 = arith.addf %6, %7 : vector<8x128xf32>
    %9 = vector.extract_strided_slice %5 {offsets = [16, 0], sizes = [8, 128], strides = [1, 1]} : vector<256x128xf32> to vector<8x128xf32>
    %10 = arith.addf %8, %9 : vector<8x128xf32>
    %11 = vector.extract_strided_slice %5 {offsets = [24, 0], sizes = [8, 128], strides = [1, 1]} : vector<256x128xf32> to vector<8x128xf32>
    %12 = arith.addf %10, %11 : vector<8x128xf32>
    %13 = vector.extract_strided_slice %5 {offsets = [32, 0], sizes = [8, 128], strides = [1, 1]} : vector<256x128xf32> to vector<8x128xf32>
    %14 = arith.addf %12, %13 : vector<8x128xf32>
    %15 = vector.extract_strided_slice %5 {offsets = [40, 0], sizes = [8, 128], strides = [1, 1]} : vector<256x128xf32> to vector<8x128xf32>
    %16 = arith.addf %14, %15 : vector<8x128xf32>
    %17 = vector.extract_strided_slice %5 {offsets = [48, 0], sizes = [8, 128], strides = [1, 1]} : vector<256x128xf32> to vector<8x128xf32>
    %18 = arith.addf %16, %17 : vector<8x128xf32>
    %19 = vector.extract_strided_slice %5 {offsets = [56, 0], sizes = [8, 128], strides = [1, 1]} : vector<256x128xf32> to vector<8x128xf32>
    %20 = arith.addf %18, %19 : vector<8x128xf32>
    %21 = vector.extract_strided_slice %5 {offsets = [64, 0], sizes = [8, 128], strides = [1, 1]} : vector<256x128xf32> to vector<8x128xf32>
    %22 = arith.addf %20, %21 : vector<8x128xf32>
    %23 = vector.extract_strided_slice %5 {offsets = [72, 0], sizes = [8, 128], strides = [1, 1]} : vector<256x128xf32> to vector<8x128xf32>
    %24 = arith.addf %22, %23 : vector<8x128xf32>
    %25 = vector.extract_strided_slice %5 {offsets = [80, 0], sizes = [8, 128], strides = [1, 1]} : vector<256x128xf32> to vector<8x128xf32>
    %26 = arith.addf %24, %25 : vector<8x128xf32>
    %27 = vector.extract_strided_slice %5 {offsets = [88, 0], sizes = [8, 128], strides = [1, 1]} : vector<256x128xf32> to vector<8x128xf32>
    %28 = arith.addf %26, %27 : vector<8x128xf32>
    %29 = vector.extract_strided_slice %5 {offsets = [96, 0], sizes = [8, 128], strides = [1, 1]} : vector<256x128xf32> to vector<8x128xf32>
    %30 = arith.addf %28, %29 : vector<8x128xf32>
    %31 = vector.extract_strided_slice %5 {offsets = [104, 0], sizes = [8, 128], strides = [1, 1]} : vector<256x128xf32> to vector<8x128xf32>
    %32 = arith.addf %30, %31 : vector<8x128xf32>
    %33 = vector.extract_strided_slice %5 {offsets = [112, 0], sizes = [8, 128], strides = [1, 1]} : vector<256x128xf32> to vector<8x128xf32>
    %34 = arith.addf %32, %33 : vector<8x128xf32>
    %35 = vector.extract_strided_slice %5 {offsets = [120, 0], sizes = [8, 128], strides = [1, 1]} : vector<256x128xf32> to vector<8x128xf32>
    %36 = arith.addf %34, %35 : vector<8x128xf32>
    %37 = vector.extract_strided_slice %5 {offsets = [128, 0], sizes = [8, 128], strides = [1, 1]} : vector<256x128xf32> to vector<8x128xf32>
    %38 = arith.addf %36, %37 : vector<8x128xf32>
    %39 = vector.extract_strided_slice %5 {offsets = [136, 0], sizes = [8, 128], strides = [1, 1]} : vector<256x128xf32> to vector<8x128xf32>
    %40 = arith.addf %38, %39 : vector<8x128xf32>
    %41 = vector.extract_strided_slice %5 {offsets = [144, 0], sizes = [8, 128], strides = [1, 1]} : vector<256x128xf32> to vector<8x128xf32>
    %42 = arith.addf %40, %41 : vector<8x128xf32>
    %43 = vector.extract_strided_slice %5 {offsets = [152, 0], sizes = [8, 128], strides = [1, 1]} : vector<256x128xf32> to vector<8x128xf32>
    %44 = arith.addf %42, %43 : vector<8x128xf32>
    %45 = vector.extract_strided_slice %5 {offsets = [160, 0], sizes = [8, 128], strides = [1, 1]} : vector<256x128xf32> to vector<8x128xf32>
    %46 = arith.addf %44, %45 : vector<8x128xf32>
    %47 = vector.extract_strided_slice %5 {offsets = [168, 0], sizes = [8, 128], strides = [1, 1]} : vector<256x128xf32> to vector<8x128xf32>
    %48 = arith.addf %46, %47 : vector<8x128xf32>
    %49 = vector.extract_strided_slice %5 {offsets = [176, 0], sizes = [8, 128], strides = [1, 1]} : vector<256x128xf32> to vector<8x128xf32>
    %50 = arith.addf %48, %49 : vector<8x128xf32>
    %51 = vector.extract_strided_slice %5 {offsets = [184, 0], sizes = [8, 128], strides = [1, 1]} : vector<256x128xf32> to vector<8x128xf32>
    %52 = arith.addf %50, %51 : vector<8x128xf32>
    %53 = vector.extract_strided_slice %5 {offsets = [192, 0], sizes = [8, 128], strides = [1, 1]} : vector<256x128xf32> to vector<8x128xf32>
    %54 = arith.addf %52, %53 : vector<8x128xf32>
    %55 = vector.extract_strided_slice %5 {offsets = [200, 0], sizes = [8, 128], strides = [1, 1]} : vector<256x128xf32> to vector<8x128xf32>
    %56 = arith.addf %54, %55 : vector<8x128xf32>
    %57 = vector.extract_strided_slice %5 {offsets = [208, 0], sizes = [8, 128], strides = [1, 1]} : vector<256x128xf32> to vector<8x128xf32>
    %58 = arith.addf %56, %57 : vector<8x128xf32>
    %59 = vector.extract_strided_slice %5 {offsets = [216, 0], sizes = [8, 128], strides = [1, 1]} : vector<256x128xf32> to vector<8x128xf32>
    %60 = arith.addf %58, %59 : vector<8x128xf32>
    %61 = vector.extract_strided_slice %5 {offsets = [224, 0], sizes = [8, 128], strides = [1, 1]} : vector<256x128xf32> to vector<8x128xf32>
    %62 = arith.addf %60, %61 : vector<8x128xf32>
    %63 = vector.extract_strided_slice %5 {offsets = [232, 0], sizes = [8, 128], strides = [1, 1]} : vector<256x128xf32> to vector<8x128xf32>
    %64 = arith.addf %62, %63 : vector<8x128xf32>
    %65 = vector.extract_strided_slice %5 {offsets = [240, 0], sizes = [8, 128], strides = [1, 1]} : vector<256x128xf32> to vector<8x128xf32>
    %66 = arith.addf %64, %65 : vector<8x128xf32>
    %67 = vector.extract_strided_slice %5 {offsets = [248, 0], sizes = [8, 128], strides = [1, 1]} : vector<256x128xf32> to vector<8x128xf32>
    %68 = arith.addf %66, %67 : vector<8x128xf32>
    %c0_5 = arith.constant 0 : index
    %c0_6 = arith.constant 0 : index
    %69 = vector.load %arg4[%c0_5, %c0_6] : memref<8x128xf32, #tpu.memory_space<vmem>>, vector<8x128xf32>
    tpu.vector_store %arg4[%c0_5, %c0_6], %68 {strides = array<i32>} : memref<8x128xf32, #tpu.memory_space<vmem>>, vector<8x128xf32>,
    return
  }
  func.func @transform_0(%arg0: i32) -> (i32, i32) {
    %c0_i32 = arith.constant 0 : i32
    %c0_i32_0 = arith.constant 0 : i32
    return %arg0, %c0_i32 : i32, i32
  }
  func.func @transform_1(%arg0: i32) -> (i32, i32) {
    %c0_i32 = arith.constant 0 : i32
    %c0_i32_0 = arith.constant 0 : i32
    return %arg0, %c0_i32 : i32, i32
  }
  func.func @transform_2(%arg0: i32) -> (i32, i32) {
    %c0_i32 = arith.constant 0 : i32
    %c0_i32_0 = arith.constant 0 : i32
    return %arg0, %c0_i32 : i32, i32
  }
  func.func @transform_3(%arg0: i32) -> (i32, i32) {
    %c0_i32 = arith.constant 0 : i32
    %c0_i32_0 = arith.constant 0 : i32
    return %arg0, %c0_i32 : i32, i32
  }
}

</mosaic_0001>

<llo_original>
// kernel: tpu_custom_call.1
$region0: #{tpu_custom_call.1}
  #allocation0 [shape = 'u32[]', space=smem, size = 0x4, offset = 0x4, fixed_abs, tag = 'smem constant byte address 0x4 - core index']
  #allocation1 [shape = 'u32[144,128]{1,0:T(1,128)}', space=vmem, size = 0x12000, scoped, tag = 'internal scratch']
  %s0 = inlined_call_operand.hbm [shape: f32[256,128], index: 0, kind: input, shape index: {}]
  %s1 = inlined_call_operand.hbm [shape: f32[256,128], index: 1, kind: input, shape index: {}]
  %s2 = inlined_call_operand.hbm [shape: f32[256,128], index: 2, kind: input, shape index: {}]
  %s3 = inlined_call_operand.hbm [shape: f32[8,128], index: 3, kind: output, shape index: {}]
  %s4 = sld [smem:[#allocation0]]
  $region34: #{tpu_custom_call.1} parent=0
    _
  %s6 = ssub.s32 1, %s4
  %s7 = scalar_select 0, %s6, %s4
  $region1: #{tpu_custom_call.1} parent=0
    #allocation2 [shape = 'u8[131072]{0}', space=vmem, size = 0x20000, scoped, tag = 'input window, operand 0, single buffered']
    #allocation3 [shape = 's32[1]{0}', space=sflag, size = 0x4, scoped, tag = 'scoped memory for tpu_custom_call.1']
    #allocation4 [shape = 's32[1]{0}', space=sflag, size = 0x4, scoped, tag = 'scoped memory for tpu_custom_call.1']
    #allocation5 [shape = 'u8[131072]{0}', space=vmem, size = 0x20000, scoped, tag = 'input window, operand 1, single buffered']
    #allocation6 [shape = 's32[1]{0}', space=sflag, size = 0x4, scoped, tag = 'scoped memory for tpu_custom_call.1']
    #allocation7 [shape = 'u8[131072]{0}', space=vmem, size = 0x20000, scoped, tag = 'input window, operand 2, single buffered']
    #allocation8 [shape = 'u8[4096]{0}', space=vmem, size = 0x1000, scoped, tag = 'output window, operand 0, single buffered']
    %8 = vsyncpa [#allocation3], 0
    %9 = vsyncpa [#allocation6], 0
    %10 = vsyncpa [#allocation4], 0
    // Predicated region
    $region2: #{tpu_custom_call.1} parent=1 // pred_check
      _
    $region3: #{tpu_custom_call.1} parent=1 // pred_check_branch
      %12 = sbr.rel (0) target = $region5
    $region4: #{tpu_custom_call.1} parent=1 // pred_region
      %s14 = ssub.s32 4096, 4096
      %15 = vsyncadd [#allocation3], %s14
      %s16 = sshll.u32 [#allocation2], 4
      %s17 = int_to_ptr.vmem [resolvable:$true] %s16
      %22 = dma.hbm_to_vmem [thread:$0]  %s0, 4096, %s17, [#allocation3], 128, 128, 8
    $region5: #{tpu_custom_call.1} parent=1 // pred_fallthru
      _
    // Predicated region
    $region6: #{tpu_custom_call.1} parent=1 // pred_check
      _
    $region7: #{tpu_custom_call.1} parent=1 // pred_check_branch
      %24 = sbr.rel (0) target = $region9
    $region8: #{tpu_custom_call.1} parent=1 // pred_region
      %s26 = ssub.s32 4096, 4096
      %27 = vsyncadd [#allocation6], %s26
      %s28 = sshll.u32 [#allocation5], 4
      %s29 = int_to_ptr.vmem [resolvable:$true] %s28
      %34 = dma.hbm_to_vmem [thread:$0]  %s1, 4096, %s29, [#allocation6], 128, 128, 8
    $region9: #{tpu_custom_call.1} parent=1 // pred_fallthru
      _
    // Predicated region
    $region10: #{tpu_custom_call.1} parent=1 // pred_check
      _
    $region11: #{tpu_custom_call.1} parent=1 // pred_check_branch
      %36 = sbr.rel (0) target = $region13
    $region12: #{tpu_custom_call.1} parent=1 // pred_region
      %s38 = ssub.s32 4096, 4096
      %39 = vsyncadd [#allocation6], %s38
      %s40 = sshll.u32 [#allocation7], 4
      %s41 = int_to_ptr.vmem [resolvable:$true] %s40
      %46 = dma.hbm_to_vmem [thread:$0]  %s2, 4096, %s41, [#allocation6], 128, 128, 8
    $region13: #{tpu_custom_call.1} parent=1 // pred_fallthru
      _
    // Predicated region
    $region14: #{tpu_custom_call.1} parent=1 // pred_check
      _
    $region15: #{tpu_custom_call.1} parent=1 // pred_check_branch
      %48 = sbr.rel (0) target = $region17
    $region16: #{tpu_custom_call.1} parent=1 // pred_region
      %49 = dma.done [#allocation3], 4096
    $region17: #{tpu_custom_call.1} parent=1 // pred_fallthru
      _
    // Predicated region
    $region18: #{tpu_custom_call.1} parent=1 // pred_check
      _
    $region19: #{tpu_custom_call.1} parent=1 // pred_check_branch
      %51 = sbr.rel (0) target = $region21
    $region20: #{tpu_custom_call.1} parent=1 // pred_region
      %52 = dma.done [#allocation6], 4096
    $region21: #{tpu_custom_call.1} parent=1 // pred_fallthru
      _
    // Predicated region
    $region22: #{tpu_custom_call.1} parent=1 // pred_check
      _
    $region23: #{tpu_custom_call.1} parent=1 // pred_check_branch
      %54 = sbr.rel (0) target = $region25
    $region24: #{tpu_custom_call.1} parent=1 // pred_region
      %55 = dma.done [#allocation6], 4096
    $region25: #{tpu_custom_call.1} parent=1 // pred_fallthru
      _
    %v56 = vld [vmem:[#allocation5] sm:$0xff]
    %v57 = vld [vmem:[#allocation5 + $0x8] sm:$0xff]
    %v58 = vld [vmem:[#allocation5 + $0x10] sm:$0xff]
    %v59 = vld [vmem:[#allocation5 + $0x18] sm:$0xff]
    %v60 = vld [vmem:[#allocation5 + $0x20] sm:$0xff]
    %v61 = vld [vmem:[#allocation5 + $0x28] sm:$0xff]
    %v62 = vld [vmem:[#allocation5 + $0x30] sm:$0xff]
    %v63 = vld [vmem:[#allocation5 + $0x38] sm:$0xff]
    %v64 = vld [vmem:[#allocation5 + $0x40] sm:$0xff]
    %v65 = vld [vmem:[#allocation5 + $0x48] sm:$0xff]
    %v66 = vld [vmem:[#allocation5 + $0x50] sm:$0xff]
    %v67 = vld [vmem:[#allocation5 + $0x58] sm:$0xff]
    %v68 = vld [vmem:[#allocation5 + $0x60] sm:$0xff]
    %v69 = vld [vmem:[#allocation5 + $0x68] sm:$0xff]
    %v70 = vld [vmem:[#allocation5 + $0x70] sm:$0xff]
    %v71 = vld [vmem:[#allocation5 + $0x78] sm:$0xff]
    %v72 = vld [vmem:[#allocation5 + $0x80] sm:$0xff]
    %v73 = vld [vmem:[#allocation5 + $0x88] sm:$0xff]
    %v74 = vld [vmem:[#allocation5 + $0x90] sm:$0xff]
    %v75 = vld [vmem:[#allocation5 + $0x98] sm:$0xff]
    %v76 = vld [vmem:[#allocation5 + $0xa0] sm:$0xff]
    %v77 = vld [vmem:[#allocation5 + $0xa8] sm:$0xff]
    %v78 = vld [vmem:[#allocation5 + $0xb0] sm:$0xff]
    %v79 = vld [vmem:[#allocation5 + $0xb8] sm:$0xff]
    %v80 = vld [vmem:[#allocation5 + $0xc0] sm:$0xff]
    %v81 = vld [vmem:[#allocation5 + $0xc8] sm:$0xff]
    %v82 = vld [vmem:[#allocation5 + $0xd0] sm:$0xff]
    %v83 = vld [vmem:[#allocation5 + $0xd8] sm:$0xff]
    %v84 = vld [vmem:[#allocation5 + $0xe0] sm:$0xff]
    %v85 = vld [vmem:[#allocation5 + $0xe8] sm:$0xff]
    %v86 = vld [vmem:[#allocation5 + $0xf0] sm:$0xff]
    %v87 = vld [vmem:[#allocation5 + $0xf8] sm:$0xff]
    %v88 = vld [vmem:[#allocation2] sm:$0xff]
    %v89 = vld [vmem:[#allocation2 + $0x8] sm:$0xff]
    %v90 = vld [vmem:[#allocation2 + $0x10] sm:$0xff]
    %v91 = vld [vmem:[#allocation2 + $0x18] sm:$0xff]
    %v92 = vld [vmem:[#allocation2 + $0x20] sm:$0xff]
    %v93 = vld [vmem:[#allocation2 + $0x28] sm:$0xff]
    %v94 = vld [vmem:[#allocation2 + $0x30] sm:$0xff]
    %v95 = vld [vmem:[#allocation2 + $0x38] sm:$0xff]
    %v96 = vld [vmem:[#allocation2 + $0x40] sm:$0xff]
    %v97 = vld [vmem:[#allocation2 + $0x48] sm:$0xff]
    %v98 = vld [vmem:[#allocation2 + $0x50] sm:$0xff]
    %v99 = vld [vmem:[#allocation2 + $0x58] sm:$0xff]
    %v100 = vld [vmem:[#allocation2 + $0x60] sm:$0xff]
    %v101 = vld [vmem:[#allocation2 + $0x68] sm:$0xff]
    %v102 = vld [vmem:[#allocation2 + $0x70] sm:$0xff]
    %v103 = vld [vmem:[#allocation2 + $0x78] sm:$0xff]
    %v104 = vld [vmem:[#allocation2 + $0x80] sm:$0xff]
    %v105 = vld [vmem:[#allocation2 + $0x88] sm:$0xff]
    %v106 = vld [vmem:[#allocation2 + $0x90] sm:$0xff]
    %v107 = vld [vmem:[#allocation2 + $0x98] sm:$0xff]
    %v108 = vld [vmem:[#allocation2 + $0xa0] sm:$0xff]
    %v109 = vld [vmem:[#allocation2 + $0xa8] sm:$0xff]
    %v110 = vld [vmem:[#allocation2 + $0xb0] sm:$0xff]
    %v111 = vld [vmem:[#allocation2 + $0xb8] sm:$0xff]
    %v112 = vld [vmem:[#allocation2 + $0xc0] sm:$0xff]
    %v113 = vld [vmem:[#allocation2 + $0xc8] sm:$0xff]
    %v114 = vld [vmem:[#allocation2 + $0xd0] sm:$0xff]
    %v115 = vld [vmem:[#allocation2 + $0xd8] sm:$0xff]
    %v116 = vld [vmem:[#allocation2 + $0xe0] sm:$0xff]
    %v117 = vld [vmem:[#allocation2 + $0xe8] sm:$0xff]
    %v118 = vld [vmem:[#allocation2 + $0xf0] sm:$0xff]
    %v119 = vld [vmem:[#allocation2 + $0xf8] sm:$0xff]
    %v120 = vsub.f32 %v56, %v88
    %v121 = vsub.f32 %v57, %v89
    %v122 = vsub.f32 %v58, %v90
    %v123 = vsub.f32 %v59, %v91
    %v124 = vsub.f32 %v60, %v92
    %v125 = vsub.f32 %v61, %v93
    %v126 = vsub.f32 %v62, %v94
    %v127 = vsub.f32 %v63, %v95
    %v128 = vsub.f32 %v64, %v96
    %v129 = vsub.f32 %v65, %v97
    %v130 = vsub.f32 %v66, %v98
    %v131 = vsub.f32 %v67, %v99
    %v132 = vsub.f32 %v68, %v100
    %v133 = vsub.f32 %v69, %v101
    %v134 = vsub.f32 %v70, %v102
    %v135 = vsub.f32 %v71, %v103
    %v136 = vsub.f32 %v72, %v104
    %v137 = vsub.f32 %v73, %v105
    %v138 = vsub.f32 %v74, %v106
    %v139 = vsub.f32 %v75, %v107
    %v140 = vsub.f32 %v76, %v108
    %v141 = vsub.f32 %v77, %v109
    %v142 = vsub.f32 %v78, %v110
    %v143 = vsub.f32 %v79, %v111
    %v144 = vsub.f32 %v80, %v112
    %v145 = vsub.f32 %v81, %v113
    %v146 = vsub.f32 %v82, %v114
    %v147 = vsub.f32 %v83, %v115
    %v148 = vsub.f32 %v84, %v116
    %v149 = vsub.f32 %v85, %v117
    %v150 = vsub.f32 %v86, %v118
    %v151 = vsub.f32 %v87, %v119
    %v152 = vmul.f32 %v120, %v120
    %v153 = vmul.f32 %v121, %v121
    %v154 = vmul.f32 %v122, %v122
    %v155 = vmul.f32 %v123, %v123
    %v156 = vmul.f32 %v124, %v124
    %v157 = vmul.f32 %v125, %v125
    %v158 = vmul.f32 %v126, %v126
    %v159 = vmul.f32 %v127, %v127
    %v160 = vmul.f32 %v128, %v128
    %v161 = vmul.f32 %v129, %v129
    %v162 = vmul.f32 %v130, %v130
    %v163 = vmul.f32 %v131, %v131
    %v164 = vmul.f32 %v132, %v132
    %v165 = vmul.f32 %v133, %v133
    %v166 = vmul.f32 %v134, %v134
    %v167 = vmul.f32 %v135, %v135
    %v168 = vmul.f32 %v136, %v136
    %v169 = vmul.f32 %v137, %v137
    %v170 = vmul.f32 %v138, %v138
    %v171 = vmul.f32 %v139, %v139
    %v172 = vmul.f32 %v140, %v140
    %v173 = vmul.f32 %v141, %v141
    %v174 = vmul.f32 %v142, %v142
    %v175 = vmul.f32 %v143, %v143
    %v176 = vmul.f32 %v144, %v144
    %v177 = vmul.f32 %v145, %v145
    %v178 = vmul.f32 %v146, %v146
    %v179 = vmul.f32 %v147, %v147
    %v180 = vmul.f32 %v148, %v148
    %v181 = vmul.f32 %v149, %v149
    %v182 = vmul.f32 %v150, %v150
    %v183 = vmul.f32 %v151, %v151
    %v184 = vld [vmem:[#allocation7] sm:$0xff]
    %v185 = vld [vmem:[#allocation7 + $0x8] sm:$0xff]
    %v186 = vld [vmem:[#allocation7 + $0x10] sm:$0xff]
    %v187 = vld [vmem:[#allocation7 + $0x18] sm:$0xff]
    %v188 = vld [vmem:[#allocation7 + $0x20] sm:$0xff]
    %v189 = vld [vmem:[#allocation7 + $0x28] sm:$0xff]
    %v190 = vld [vmem:[#allocation7 + $0x30] sm:$0xff]
    %v191 = vld [vmem:[#allocation7 + $0x38] sm:$0xff]
    %v192 = vld [vmem:[#allocation7 + $0x40] sm:$0xff]
    %v193 = vld [vmem:[#allocation7 + $0x48] sm:$0xff]
    %v194 = vld [vmem:[#allocation7 + $0x50] sm:$0xff]
    %v195 = vld [vmem:[#allocation7 + $0x58] sm:$0xff]
    %v196 = vld [vmem:[#allocation7 + $0x60] sm:$0xff]
    %v197 = vld [vmem:[#allocation7 + $0x68] sm:$0xff]
    %v198 = vld [vmem:[#allocation7 + $0x70] sm:$0xff]
    %v199 = vld [vmem:[#allocation7 + $0x78] sm:$0xff]
    %v200 = vld [vmem:[#allocation7 + $0x80] sm:$0xff]
    %v201 = vld [vmem:[#allocation7 + $0x88] sm:$0xff]
    %v202 = vld [vmem:[#allocation7 + $0x90] sm:$0xff]
    %v203 = vld [vmem:[#allocation7 + $0x98] sm:$0xff]
    %v204 = vld [vmem:[#allocation7 + $0xa0] sm:$0xff]
    %v205 = vld [vmem:[#allocation7 + $0xa8] sm:$0xff]
    %v206 = vld [vmem:[#allocation7 + $0xb0] sm:$0xff]
    %v207 = vld [vmem:[#allocation7 + $0xb8] sm:$0xff]
    %v208 = vld [vmem:[#allocation7 + $0xc0] sm:$0xff]
    %v209 = vld [vmem:[#allocation7 + $0xc8] sm:$0xff]
    %v210 = vld [vmem:[#allocation7 + $0xd0] sm:$0xff]
    %v211 = vld [vmem:[#allocation7 + $0xd8] sm:$0xff]
    %v212 = vld [vmem:[#allocation7 + $0xe0] sm:$0xff]
    %v213 = vld [vmem:[#allocation7 + $0xe8] sm:$0xff]
    %v214 = vld [vmem:[#allocation7 + $0xf0] sm:$0xff]
    %v215 = vld [vmem:[#allocation7 + $0xf8] sm:$0xff]
    %v216 = vmul.f32 %v152, %v184
    %v217 = vmul.f32 %v153, %v185
    %v218 = vmul.f32 %v154, %v186
    %v219 = vmul.f32 %v155, %v187
    %v220 = vmul.f32 %v156, %v188
    %v221 = vmul.f32 %v157, %v189
    %v222 = vmul.f32 %v158, %v190
    %v223 = vmul.f32 %v159, %v191
    %v224 = vmul.f32 %v160, %v192
    %v225 = vmul.f32 %v161, %v193
    %v226 = vmul.f32 %v162, %v194
    %v227 = vmul.f32 %v163, %v195
    %v228 = vmul.f32 %v164, %v196
    %v229 = vmul.f32 %v165, %v197
    %v230 = vmul.f32 %v166, %v198
    %v231 = vmul.f32 %v167, %v199
    %v232 = vmul.f32 %v168, %v200
    %v233 = vmul.f32 %v169, %v201
    %v234 = vmul.f32 %v170, %v202
    %v235 = vmul.f32 %v171, %v203
    %v236 = vmul.f32 %v172, %v204
    %v237 = vmul.f32 %v173, %v205
    %v238 = vmul.f32 %v174, %v206
    %v239 = vmul.f32 %v175, %v207
    %v240 = vmul.f32 %v176, %v208
    %v241 = vmul.f32 %v177, %v209
    %v242 = vmul.f32 %v178, %v210
    %v243 = vmul.f32 %v179, %v211
    %v244 = vmul.f32 %v180, %v212
    %v245 = vmul.f32 %v181, %v213
    %v246 = vmul.f32 %v182, %v214
    %v247 = vmul.f32 %v183, %v215
    %v248 = vadd.f32 %v216, %v217
    %v249 = vadd.f32 %v248, %v218
    %v250 = vadd.f32 %v249, %v219
    %v251 = vadd.f32 %v250, %v220
    %v252 = vadd.f32 %v251, %v221
    %v253 = vadd.f32 %v252, %v222
    %v254 = vadd.f32 %v253, %v223
    %v255 = vadd.f32 %v254, %v224
    %v256 = vadd.f32 %v255, %v225
    %v257 = vadd.f32 %v256, %v226
    %v258 = vadd.f32 %v257, %v227
    %v259 = vadd.f32 %v258, %v228
    %v260 = vadd.f32 %v259, %v229
    %v261 = vadd.f32 %v260, %v230
    %v262 = vadd.f32 %v261, %v231
    %v263 = vadd.f32 %v262, %v232
    %v264 = vadd.f32 %v263, %v233
    %v265 = vadd.f32 %v264, %v234
    %v266 = vadd.f32 %v265, %v235
    %v267 = vadd.f32 %v266, %v236
    %v268 = vadd.f32 %v267, %v237
    %v269 = vadd.f32 %v268, %v238
    %v270 = vadd.f32 %v269, %v239
    %v271 = vadd.f32 %v270, %v240
    %v272 = vadd.f32 %v271, %v241
    %v273 = vadd.f32 %v272, %v242
    %v274 = vadd.f32 %v273, %v243
    %v275 = vadd.f32 %v274, %v244
    %v276 = vadd.f32 %v275, %v245
    %v277 = vadd.f32 %v276, %v246
    %v278 = vadd.f32 %v277, %v247
    %279 = vst [vmem:[#allocation8] sm:$0xff] %v278
    // Predicated region
    $region26: #{tpu_custom_call.1} parent=1 // pred_check
      _
    $region27: #{tpu_custom_call.1} parent=1 // pred_check_branch
      %281 = sbr.rel (0) target = $region29
    $region28: #{tpu_custom_call.1} parent=1 // pred_region
      %s283 = ssub.s32 128, 128
      %284 = vsyncadd [#allocation4], %s283
      %s286 = sshll.u32 [#allocation8], 4
      %s287 = int_to_ptr.vmem [resolvable:$true] %s286
      %289 = dma.vmem_to_hbm [thread:$0]  %s287, 128, %s3, [#allocation4]
    $region29: #{tpu_custom_call.1} parent=1 // pred_fallthru
      _
    // Predicated region
    $region30: #{tpu_custom_call.1} parent=1 // pred_check
      _
    $region31: #{tpu_custom_call.1} parent=1 // pred_check_branch
      %291 = sbr.rel (0) target = $region33
    $region32: #{tpu_custom_call.1} parent=1 // pred_region
      %292 = dma.done [#allocation4], 128
    $region33: #{tpu_custom_call.1} parent=1 // pred_fallthru
      _
    %293 = vsyncpa [#allocation3], 1
    %294 = vsyncpa [#allocation6], 1
    %295 = vsyncpa [#allocation4], 1

</llo_original>
